<compile_context>
chip_gen: v5e
topology: v5e:2x2
jax: 0.10.0
libtpu: 0.0.40
codegen_flags: <defaults>
</compile_context>

<pallas_src>
import functools

import jax
import jax.numpy as jnp
from jax.experimental import pallas as pl
from jax.experimental.pallas import tpu as pltpu


def _round_up(n, m):
    return ((n + m - 1) // m) * m


def _masked_tv_kernel(mh_ref, mw_ref, x_ref, ns_ref, num_ref, den_ref, *,
                      w, wl, beta):
    """One batch tile.  x_ref/ns_ref: (bt, WP) with WP >= wl + w.

    Flat position p = i*W + j.  W-neighbour of p is p+1, H-neighbour is p+w.
    mh/mw already encode: both endpoints inside the region AND the pair does
    not wrap a row / fall off the last row / land in the padding.
    """
    xf = x_ref[...].astype(jnp.float32)          # (bt, WP)
    nsf = ns_ref[...].astype(jnp.float32)        # (bt, WP) 1.0 = not a station
    mh = mh_ref[...]                             # (1, wl)
    mw = mw_ref[...]                             # (1, wl)

    x0 = xf[:, 0:wl]
    ns0 = nsf[:, 0:wl]

    # 0/1 valid-pair masks, kept at full lane-dense (bt, wl) width.
    vh = ns0 * nsf[:, 1:1 + wl] * mh
    vw = ns0 * nsf[:, w:w + wl] * mw

    if beta == 0.5:
        pen = lambda d: jnp.sqrt(jnp.abs(d))
    elif beta == 1.0:
        pen = jnp.abs
    elif beta == 2.0:
        pen = lambda d: d * d                    # pure VALU, no abs / power
    else:
        # NOTE: jnp.power lowers to exp+log (EUP heavy) -- avoided for the
        # common beta values above.
        pen = lambda d: jnp.power(jnp.abs(d), jnp.float32(beta))

    num = pen(xf[:, 1:1 + wl] - x0) * vh + pen(xf[:, w:w + wl] - x0) * vw
    den = vh + vw

    # Partial reduce over the batch-tile axis only (vreg adds + one sublane
    # reduce per lane column); lane axis stays unreduced and dense.
    num_ref[...] = jnp.sum(num, axis=0).reshape(num_ref.shape)
    den_ref[...] = jnp.sum(den, axis=0).reshape(den_ref.shape)


def _pick_batch_tile(B, WP, WL, x_itemsize, budget_bytes=12 << 20):
    # Rough per-row VMEM cost: double-buffered inputs (x + int8 mask) plus
    # ~8 live full-width f32 temporaries inside the kernel.
    per_row = 2 * WP * (x_itemsize + 1) + 8 * 4 * WP
    bt0 = max(32, (budget_bytes // max(per_row, 1)) // 32 * 32)
    b32 = _round_up(B, 32)
    bt = min(bt0, b32)
    # Ensure >= 2 grid steps when the batch allows it (keeps both TensorCores
    # busy on v7x via the "parallel" grid axis).
    if b32 >= 64 and b32 // bt < 2:
        bt = max(32, (b32 // 2) // 32 * 32)
    return bt


def masked_tv_loss(x, station_mask, mask_2d, tv_loss_weight=1.0, beta=0.5):
    """
    x:            [B, 1, H, W]  predicted field
    station_mask: [B, 1, H, W]  1 = station, 0 = else
    mask_2d:      [H, W]        1 = inside region, 0 = outside
    Returns: scalar float32 loss.
    """
    B, C, H, W = x.shape
    assert C == 1, "module assumes a single channel"

    HW = H * W
    WL = _round_up(HW, 128)                  # lane-dense working width
    WP = WL + _round_up(W, 128)              # + room for the +1 / +W shifted reads

    bt = _pick_batch_tile(B, WP, WL, jnp.dtype(x.dtype).itemsize)
    B_pad = _round_up(B, bt)
    G = B_pad // bt

    # ---- wrapper-side layout plumbing (flatten + pad) ----------------------
    x2 = x.reshape(B, HW)
    x_pad = jnp.pad(x2, ((0, B_pad - B), (0, WP - HW)))
    # "not a station": compare in the original dtype (exact == 0 semantics),
    # then stream as int8.  Padded rows/columns get 0 => contribute nothing.
    ns2 = (station_mask.reshape(B, HW) == 0).astype(jnp.int8)
    ns_pad = jnp.pad(ns2, ((0, B_pad - B), (0, WP - HW)))

    # Batch-invariant pair masks from mask_2d (hoisted out of the kernel).
    m = (mask_2d.reshape(HW) == 1).astype(jnp.float32)
    idx = jnp.arange(HW)
    m_right = jnp.concatenate([m[1:], jnp.zeros((1,), jnp.float32)])
    m_down = jnp.concatenate([m[W:], jnp.zeros((W,), jnp.float32)])
    mh = m * m_right * (idx % W < W - 1).astype(jnp.float32)    # no row wrap
    mw = m * m_down * (idx < (H - 1) * W).astype(jnp.float32)   # no last-row pair
    mh = jnp.pad(mh, (0, WL - HW)).reshape(1, WL)
    mw = jnp.pad(mw, (0, WL - HW)).reshape(1, WL)

    kernel = functools.partial(_masked_tv_kernel, w=W, wl=WL, beta=beta)

    num_part, den_part = pl.pallas_call(
        kernel,
        out_shape=(
            jax.ShapeDtypeStruct((G, 1, WL), jnp.float32),
            jax.ShapeDtypeStruct((G, 1, WL), jnp.float32),
        ),
        grid_spec=pltpu.PrefetchScalarGridSpec(
            num_scalar_prefetch=0,
            grid=(G,),
            in_specs=[
                pl.BlockSpec((1, WL), lambda g: (0, 0)),        # mh (shared)
                pl.BlockSpec((1, WL), lambda g: (0, 0)),        # mw (shared)
                pl.BlockSpec((bt, WP), lambda g: (g, 0)),       # x
                pl.BlockSpec((bt, WP), lambda g: (g, 0)),       # not-a-station (int8)
            ],
            out_specs=[
                pl.BlockSpec((1, 1, WL), lambda g: (g, 0, 0)),  # partial numerator
                pl.BlockSpec((1, 1, WL), lambda g: (g, 0, 0)),  # partial denominator
            ],
        ),
        compiler_params=pltpu.CompilerParams(
            dimension_semantics=("parallel",),
            vmem_limit_bytes=32 * 1024 * 1024),
    )(mh, mw, x_pad, ns_pad)

    # Tiny epilogue: combine per-block lane-dense partials, clamp, divide.
    num = jnp.sum(num_part)
    den = jnp.sum(den_part)
    return jnp.asarray(tv_loss_weight, jnp.float32) * num / jnp.maximum(
        den, jnp.float32(1.0))


def _reference_tv_loss(x, station_mask, mask_2d, tv_loss_weight=1.0, beta=0.5):
    mask = mask_2d[None, None, :, :]
    sm = station_mask.astype(jnp.float32)
    valid = jnp.logical_and(mask == 1, sm == 0).astype(jnp.float32)
    dh = jnp.abs(x[:, :, :, 1:] - x[:, :, :, :-1]) ** beta
    dw = jnp.abs(x[:, :, 1:, :] - x[:, :, :-1, :]) ** beta
    vh = valid[:, :, :, 1:] * valid[:, :, :, :-1]
    vw = valid[:, :, 1:, :] * valid[:, :, :-1, :]
    tv = ((dh * vh).sum() + (dw * vw).sum()) / jnp.maximum(
        vh.sum() + vw.sum(), 1.0)
    return tv_loss_weight * tv


if __name__ == "__main__":
    key = jax.random.PRNGKey(0)
    B, C, H, W = 2, 1, 16, 16

    k1, k2, k3 = jax.random.split(key, 3)
    x = jax.random.normal(k1, (B, C, H, W), dtype=jnp.float32)
    # station_mask: sparse 0/1 mask (1 = station)
    station_mask = (jax.random.uniform(k2, (B, C, H, W)) < 0.1).astype(jnp.float32)
    # mask_2d: fixed "inside region" buffer
    mask_2d = (jax.random.uniform(k3, (H, W)) < 0.7).astype(jnp.float32)

    for beta, wgt in ((0.5, 1.0), (1.0, 0.7), (2.0, 1.3)):
        loss = masked_tv_loss(x, station_mask, mask_2d,
                              tv_loss_weight=wgt, beta=beta)
        loss = jax.block_until_ready(loss)
        ref = _reference_tv_loss(x, station_mask, mask_2d, wgt, beta)
        assert jnp.allclose(loss, ref, rtol=2e-5, atol=1e-6), (beta, loss, ref)

    print("KERNEL_OK")
</pallas_src>

<mosaic_0001>
module attributes {stable_mosaic.version = 11 : i64} {
  func.func @_masked_tv_kernel(%arg0: i32, %arg1: memref<1x256xf32, #tpu.memory_space<vmem>>, %arg2: memref<1x256xf32, #tpu.memory_space<vmem>>, %arg3: memref<32x384xf32, #tpu.memory_space<vmem>>, %arg4: memref<32x384xi8, #tpu.memory_space<vmem>>, %arg5: memref<1x1x256xf32, #tpu.memory_space<vmem>>, %arg6: memref<1x1x256xf32, #tpu.memory_space<vmem>>) attributes {dimension_semantics = [#tpu.dimension_semantics<parallel>], iteration_bounds = array<i64: 1>, scalar_prefetch = 0 : i64, scratch_operands = 0 : i64, tpu.core_type = #tpu.core_type<tc>, window_params = [{pipeline_mode = #tpu.pipeline_mode<synchronous>, transform_indices = @transform_0, window_bounds = array<i64: 1, 256>}, {pipeline_mode = #tpu.pipeline_mode<synchronous>, transform_indices = @transform_1, window_bounds = array<i64: 1, 256>}, {transform_indices = @transform_2, window_bounds = array<i64: 32, 384>}, {transform_indices = @transform_3, window_bounds = array<i64: 32, 384>}, {transform_indices = @transform_4, window_bounds = array<i64: 1, 1, 256>}, {transform_indices = @transform_5, window_bounds = array<i64: 1, 1, 256>}]} {
    %c0 = arith.constant 0 : index
    %c0_0 = arith.constant 0 : index
    %0 = vector.load %arg3[%c0, %c0_0] : memref<32x384xf32, #tpu.memory_space<vmem>>, vector<32x384xf32>
    %c0_1 = arith.constant 0 : index
    %c0_2 = arith.constant 0 : index
    %1 = vector.load %arg4[%c0_1, %c0_2] : memref<32x384xi8, #tpu.memory_space<vmem>>, vector<32x384xi8>
    %2 = arith.sitofp %1 : vector<32x384xi8> to vector<32x384xf32>
    %c0_3 = arith.constant 0 : index
    %c0_4 = arith.constant 0 : index
    %3 = vector.load %arg1[%c0_3, %c0_4] : memref<1x256xf32, #tpu.memory_space<vmem>>, vector<1x256xf32>
    %c0_5 = arith.constant 0 : index
    %c0_6 = arith.constant 0 : index
    %4 = vector.load %arg2[%c0_5, %c0_6] : memref<1x256xf32, #tpu.memory_space<vmem>>, vector<1x256xf32>
    %5 = vector.extract_strided_slice %0 {offsets = [0, 0], sizes = [32, 256], strides = [1, 1]} : vector<32x384xf32> to vector<32x256xf32>
    %6 = vector.extract_strided_slice %2 {offsets = [0, 0], sizes = [32, 256], strides = [1, 1]} : vector<32x384xf32> to vector<32x256xf32>
    %7 = vector.extract_strided_slice %2 {offsets = [0, 1], sizes = [32, 256], strides = [1, 1]} : vector<32x384xf32> to vector<32x256xf32>
    %8 = arith.mulf %6, %7 : vector<32x256xf32>
    %9 = vector.broadcast %3 : vector<1x256xf32> to vector<32x256xf32>
    %10 = arith.mulf %8, %9 : vector<32x256xf32>
    %11 = vector.extract_strided_slice %2 {offsets = [0, 16], sizes = [32, 256], strides = [1, 1]} : vector<32x384xf32> to vector<32x256xf32>
    %12 = arith.mulf %6, %11 : vector<32x256xf32>
    %13 = vector.broadcast %4 : vector<1x256xf32> to vector<32x256xf32>
    %14 = arith.mulf %12, %13 : vector<32x256xf32>
    %15 = vector.extract_strided_slice %0 {offsets = [0, 1], sizes = [32, 256], strides = [1, 1]} : vector<32x384xf32> to vector<32x256xf32>
    %16 = arith.subf %15, %5 : vector<32x256xf32>
    %17 = math.absf %16 : vector<32x256xf32>
    %18 = math.sqrt %17 : vector<32x256xf32>
    %19 = arith.mulf %18, %10 : vector<32x256xf32>
    %20 = vector.extract_strided_slice %0 {offsets = [0, 16], sizes = [32, 256], strides = [1, 1]} : vector<32x384xf32> to vector<32x256xf32>
    %21 = arith.subf %20, %5 : vector<32x256xf32>
    %22 = math.absf %21 : vector<32x256xf32>
    %23 = math.sqrt %22 : vector<32x256xf32>
    %24 = arith.mulf %23, %14 : vector<32x256xf32>
    %25 = arith.addf %19, %24 : vector<32x256xf32>
    %26 = arith.addf %10, %14 : vector<32x256xf32>
    %cst = arith.constant dense<0.000000e+00> : vector<256xf32>
    %27 = vector.multi_reduction <add>, %25, %cst [0] : vector<32x256xf32> to vector<256xf32>
    %28 = vector.shape_cast %27 : vector<256xf32> to vector<1x1x256xf32>
    %c0_7 = arith.constant 0 : index
    %c0_8 = arith.constant 0 : index
    %c0_9 = arith.constant 0 : index
    %29 = vector.load %arg5[%c0_7, %c0_8, %c0_9] : memref<1x1x256xf32, #tpu.memory_space<vmem>>, vector<1x1x256xf32>
    tpu.vector_store %arg5[%c0_7, %c0_8, %c0_9], %28 {strides = array<i32>} : memref<1x1x256xf32, #tpu.memory_space<vmem>>, vector<1x1x256xf32>,
    %cst_10 = arith.constant dense<0.000000e+00> : vector<256xf32>
    %30 = vector.multi_reduction <add>, %26, %cst_10 [0] : vector<32x256xf32> to vector<256xf32>
    %31 = vector.shape_cast %30 : vector<256xf32> to vector<1x1x256xf32>
    %c0_11 = arith.constant 0 : index
    %c0_12 = arith.constant 0 : index
    %c0_13 = arith.constant 0 : index
    %32 = vector.load %arg6[%c0_11, %c0_12, %c0_13] : memref<1x1x256xf32, #tpu.memory_space<vmem>>, vector<1x1x256xf32>
    tpu.vector_store %arg6[%c0_11, %c0_12, %c0_13], %31 {strides = array<i32>} : memref<1x1x256xf32, #tpu.memory_space<vmem>>, vector<1x1x256xf32>,
    return
  }
  func.func @transform_0(%arg0: i32) -> (i32, i32) {
    %c0_i32 = arith.constant 0 : i32
    %c0_i32_0 = arith.constant 0 : i32
    %c0_i32_1 = arith.constant 0 : i32
    return %c0_i32, %c0_i32_0 : i32, i32
  }
  func.func @transform_1(%arg0: i32) -> (i32, i32) {
    %c0_i32 = arith.constant 0 : i32
    %c0_i32_0 = arith.constant 0 : i32
    %c0_i32_1 = arith.constant 0 : i32
    return %c0_i32, %c0_i32_0 : i32, i32
  }
  func.func @transform_2(%arg0: i32) -> (i32, i32) {
    %c0_i32 = arith.constant 0 : i32
    %c0_i32_0 = arith.constant 0 : i32
    return %arg0, %c0_i32 : i32, i32
  }
  func.func @transform_3(%arg0: i32) -> (i32, i32) {
    %c0_i32 = arith.constant 0 : i32
    %c0_i32_0 = arith.constant 0 : i32
    return %arg0, %c0_i32 : i32, i32
  }
  func.func @transform_4(%arg0: i32) -> (i32, i32, i32) {
    %c0_i32 = arith.constant 0 : i32
    %c0_i32_0 = arith.constant 0 : i32
    %c0_i32_1 = arith.constant 0 : i32
    return %arg0, %c0_i32, %c0_i32_0 : i32, i32, i32
  }
  func.func @transform_5(%arg0: i32) -> (i32, i32, i32) {
    %c0_i32 = arith.constant 0 : i32
    %c0_i32_0 = arith.constant 0 : i32
    %c0_i32_1 = arith.constant 0 : i32
    return %arg0, %c0_i32, %c0_i32_0 : i32, i32, i32
  }
}

</mosaic_0001>

<llo_original>
// kernel: tpu_custom_call.1
$region0: #{tpu_custom_call.1}
  #allocation0 [shape = 'u32[]', space=smem, size = 0x4, offset = 0x4, fixed_abs, tag = 'smem constant byte address 0x4 - core index']
  #allocation1 [shape = 'u32[72,128]{1,0:T(1,128)}', space=vmem, size = 0x9000, scoped, tag = 'internal scratch']
  %s0 = inlined_call_operand.hbm [shape: f32[1,256], index: 0, kind: input, shape index: {}]
  %s1 = inlined_call_operand.hbm [shape: f32[1,256], index: 1, kind: input, shape index: {}]
  %s2 = inlined_call_operand.hbm [shape: f32[32,384], index: 2, kind: input, shape index: {}]
  %s3 = inlined_call_operand.hbm [shape: s8[32,384], index: 3, kind: input, shape index: {}]
  %s4 = inlined_call_operand.hbm [shape: f32[1,1,256], index: 4, kind: output, shape index: {0}]
  %s5 = inlined_call_operand.hbm [shape: f32[1,1,256], index: 5, kind: output, shape index: {1}]
  %6 = xla_tuple %s4, %s5
  %s7 = sld [smem:[#allocation0]]
  $region50: #{tpu_custom_call.1} parent=0
    _
  %s9 = ssub.s32 1, %s7
  %s10 = scalar_select 0, %s9, %s7
  $region1: #{tpu_custom_call.1} parent=0
    #allocation2 [shape = 'u8[1024]{0}', space=vmem, size = 0x400, scoped, tag = 'input window, operand 0, single buffered']
    #allocation3 [shape = 's32[1]{0}', space=sflag, size = 0x4, scoped, tag = 'scoped memory for tpu_custom_call.1']
    #allocation4 [shape = 's32[1]{0}', space=sflag, size = 0x4, scoped, tag = 'scoped memory for tpu_custom_call.1']
    #allocation5 [shape = 'u8[1024]{0}', space=vmem, size = 0x400, scoped, tag = 'input window, operand 1, single buffered']
    #allocation6 [shape = 's32[1]{0}', space=sflag, size = 0x4, scoped, tag = 'scoped memory for tpu_custom_call.1']
    #allocation7 [shape = 'u8[49152]{0}', space=vmem, size = 0xc000, scoped, tag = 'input window, operand 2, single buffered']
    #allocation8 [shape = 'u8[12288]{0}', space=vmem, size = 0x3000, scoped, tag = 'input window, operand 3, single buffered']
    #allocation9 [shape = 's32[1]{0}', space=sflag, size = 0x4, scoped, tag = 'scoped memory for tpu_custom_call.1']
    #allocation10 [shape = 'u8[1024]{0}', space=vmem, size = 0x400, scoped, tag = 'output window, operand 0, single buffered']
    #allocation11 [shape = 'u8[1024]{0}', space=vmem, size = 0x400, scoped, tag = 'output window, operand 1, single buffered']
    #allocation12 [shape = 's32[1]{0}', space=sflag, size = 0x4, scoped, tag = 'scoped memory for tpu_custom_call.1']
    %11 = vsyncpa [#allocation3], 0
    %12 = vsyncpa [#allocation6], 0
    %13 = vsyncpa [#allocation9], 0
    %14 = vsyncpa [#allocation4], 0
    %15 = vsyncpa [#allocation12], 0
    // Predicated region
    $region2: #{tpu_custom_call.1} parent=1 // pred_check
      _
    $region3: #{tpu_custom_call.1} parent=1 // pred_check_branch
      %17 = sbr.rel (0) target = $region5
    $region4: #{tpu_custom_call.1} parent=1 // pred_region
      %19 = vsyncadd [#allocation3], 0
      %s21 = sshll.u32 %s0, 4
      %s22 = int_to_ptr.hbm [resolvable:$true] %s21
      %s23 = sshll.u32 [#allocation2], 4
      %s24 = int_to_ptr.vmem [resolvable:$true] %s23
      %26 = dma.hbm_to_vmem [thread:$0]  %s22, 32, %s24, [#allocation3]
    $region5: #{tpu_custom_call.1} parent=1 // pred_fallthru
      _
    // Predicated region
    $region6: #{tpu_custom_call.1} parent=1 // pred_check
      _
    $region7: #{tpu_custom_call.1} parent=1 // pred_check_branch
      %28 = sbr.rel (0) target = $region9
    $region8: #{tpu_custom_call.1} parent=1 // pred_region
      %30 = vsyncadd [#allocation6], 0
      %s32 = sshll.u32 %s1, 4
      %s33 = int_to_ptr.hbm [resolvable:$true] %s32
      %s34 = sshll.u32 [#allocation5], 4
      %s35 = int_to_ptr.vmem [resolvable:$true] %s34
      %37 = dma.hbm_to_vmem [thread:$0]  %s33, 32, %s35, [#allocation6]
    $region9: #{tpu_custom_call.1} parent=1 // pred_fallthru
      _
    // Predicated region
    $region10: #{tpu_custom_call.1} parent=1 // pred_check
      _
    $region11: #{tpu_custom_call.1} parent=1 // pred_check_branch
      %39 = sbr.rel (0) target = $region13
    $region12: #{tpu_custom_call.1} parent=1 // pred_region
      %41 = vsyncadd [#allocation6], 0
      %s42 = sshll.u32 %s2, 4
      %s43 = int_to_ptr.hbm [resolvable:$true] %s42
      %s44 = sshll.u32 [#allocation7], 4
      %s45 = int_to_ptr.vmem [resolvable:$true] %s44
      %50 = dma.hbm_to_vmem [thread:$0]  %s43, 1536, %s45, [#allocation6], 384, 384, 24
    $region13: #{tpu_custom_call.1} parent=1 // pred_fallthru
      _
    // Predicated region
    $region14: #{tpu_custom_call.1} parent=1 // pred_check
      _
    $region15: #{tpu_custom_call.1} parent=1 // pred_check_branch
      %52 = sbr.rel (0) target = $region17
    $region16: #{tpu_custom_call.1} parent=1 // pred_region
      %54 = vsyncadd [#allocation9], 0
      %s56 = sshll.u32 %s3, 4
      %s57 = int_to_ptr.hbm [resolvable:$true] %s56
      %s58 = sshll.u32 [#allocation8], 4
      %s59 = int_to_ptr.vmem [resolvable:$true] %s58
      %61 = dma.hbm_to_vmem [thread:$0]  %s57, 384, %s59, [#allocation9]
    $region17: #{tpu_custom_call.1} parent=1 // pred_fallthru
      _
    // Predicated region
    $region18: #{tpu_custom_call.1} parent=1 // pred_check
      _
    $region19: #{tpu_custom_call.1} parent=1 // pred_check_branch
      %63 = sbr.rel (0) target = $region21
    $region20: #{tpu_custom_call.1} parent=1 // pred_region
      %65 = dma.done [#allocation3], 32
    $region21: #{tpu_custom_call.1} parent=1 // pred_fallthru
      _
    // Predicated region
    $region22: #{tpu_custom_call.1} parent=1 // pred_check
      _
    $region23: #{tpu_custom_call.1} parent=1 // pred_check_branch
      %67 = sbr.rel (0) target = $region25
    $region24: #{tpu_custom_call.1} parent=1 // pred_region
      %69 = dma.done [#allocation6], 32
    $region25: #{tpu_custom_call.1} parent=1 // pred_fallthru
      _
    // Predicated region
    $region26: #{tpu_custom_call.1} parent=1 // pred_check
      _
    $region27: #{tpu_custom_call.1} parent=1 // pred_check_branch
      %71 = sbr.rel (0) target = $region29
    $region28: #{tpu_custom_call.1} parent=1 // pred_region
      %73 = dma.done [#allocation6], 1536
    $region29: #{tpu_custom_call.1} parent=1 // pred_fallthru
      _
    // Predicated region
    $region30: #{tpu_custom_call.1} parent=1 // pred_check
      _
    $region31: #{tpu_custom_call.1} parent=1 // pred_check_branch
      %75 = sbr.rel (0) target = $region33
    $region32: #{tpu_custom_call.1} parent=1 // pred_region
      %77 = dma.done [#allocation9], 384
    $region33: #{tpu_custom_call.1} parent=1 // pred_fallthru
      _
    %v78 = vld [vmem:[#allocation7] sm:$0xff]
    %v79 = vld [vmem:[#allocation7 + $0x8] sm:$0xff]
    %v80 = vld [vmem:[#allocation7 + $0x10] sm:$0xff]
    %v81 = vld [vmem:[#allocation7 + $0x18] sm:$0xff]
    %v82 = vld [vmem:[#allocation7 + $0x20] sm:$0xff]
    %v83 = vld [vmem:[#allocation7 + $0x28] sm:$0xff]
    %v84 = vld [vmem:[#allocation7 + $0x30] sm:$0xff]
    %v85 = vld [vmem:[#allocation7 + $0x38] sm:$0xff]
    %v86 = vld [vmem:[#allocation7 + $0x40] sm:$0xff]
    %v87 = vld [vmem:[#allocation7 + $0x48] sm:$0xff]
    %v88 = vld [vmem:[#allocation7 + $0x50] sm:$0xff]
    %v89 = vld [vmem:[#allocation7 + $0x58] sm:$0xff]
    %v90 = vld [vmem:[#allocation8] sm:$0xff]
    %v91 = vld [vmem:[#allocation8 + $0x8] sm:$0xff]
    %v92 = vld [vmem:[#allocation8 + $0x10] sm:$0xff]
    %v93 = vunpack.c.0.s8 %v90
    %v94 = vunpack.c.0.s8 %v91
    %v95 = vunpack.c.0.s8 %v92
    %v96 = vunpack.c.1.s8 %v90
    %v97 = vunpack.c.1.s8 %v91
    %v98 = vunpack.c.1.s8 %v92
    %v99 = vunpack.c.2.s8 %v90
    %v100 = vunpack.c.2.s8 %v91
    %v101 = vunpack.c.2.s8 %v92
    %v102 = vunpack.c.3.s8 %v90
    %v103 = vunpack.c.3.s8 %v91
    %v104 = vunpack.c.3.s8 %v92
    %v105 = vcvt.s32.f32 %v93
    %v106 = vcvt.s32.f32 %v94
    %v107 = vcvt.s32.f32 %v95
    %v108 = vcvt.s32.f32 %v96
    %v109 = vcvt.s32.f32 %v97
    %v110 = vcvt.s32.f32 %v98
    %v111 = vcvt.s32.f32 %v99
    %v112 = vcvt.s32.f32 %v100
    %v113 = vcvt.s32.f32 %v101
    %v114 = vcvt.s32.f32 %v102
    %v115 = vcvt.s32.f32 %v103
    %v116 = vcvt.s32.f32 %v104
    %v117 = vld [vmem:[#allocation2] sm:$0x3]
    %v118 = vld [vmem:[#allocation5] sm:$0x3]
    %131 = vrot.lane.b32.xlu0 %v105, 127
    %v132 = vpop.permute.xlu0 %131
    %133 = vrot.lane.b32.xlu0 %v106, 127
    %v134 = vpop.permute.xlu0 %133
    %135 = vrot.lane.b32.xlu0 %v107, 127
    %v136 = vpop.permute.xlu0 %135
    %137 = vrot.lane.b32.xlu0 %v108, 127
    %v138 = vpop.permute.xlu0 %137
    %139 = vrot.lane.b32.xlu0 %v109, 127
    %v140 = vpop.permute.xlu0 %139
    %141 = vrot.lane.b32.xlu0 %v110, 127
    %v142 = vpop.permute.xlu0 %141
    %143 = vrot.lane.b32.xlu0 %v111, 127
    %v144 = vpop.permute.xlu0 %143
    %145 = vrot.lane.b32.xlu0 %v112, 127
    %v146 = vpop.permute.xlu0 %145
    %147 = vrot.lane.b32.xlu0 %v113, 127
    %v148 = vpop.permute.xlu0 %147
    %149 = vrot.lane.b32.xlu0 %v114, 127
    %v150 = vpop.permute.xlu0 %149
    %151 = vrot.lane.b32.xlu0 %v115, 127
    %v152 = vpop.permute.xlu0 %151
    %153 = vrot.lane.b32.xlu0 %v116, 127
    %v154 = vpop.permute.xlu0 %153
    %vm155 = vcmask 1039360
    %v156 = vsel %vm155, %v132, %v134
    %v157 = vsel %vm155, %v134, %v136
    %v158 = vsel %vm155, %v138, %v140
    %v159 = vsel %vm155, %v140, %v142
    %v160 = vsel %vm155, %v144, %v146
    %v161 = vsel %vm155, %v146, %v148
    %v162 = vsel %vm155, %v150, %v152
    %v163 = vsel %vm155, %v152, %v154
    %v172 = vmul.f32 %v105, %v156
    %v173 = vmul.f32 %v106, %v157
    %v174 = vmul.f32 %v108, %v158
    %v175 = vmul.f32 %v109, %v159
    %v176 = vmul.f32 %v111, %v160
    %v177 = vmul.f32 %v112, %v161
    %v178 = vmul.f32 %v114, %v162
    %v179 = vmul.f32 %v115, %v163
    %v181 = vperm.slane %v117, 0
    %v182 = vperm.slane %v117, 1
    %v185 = vmul.f32 %v172, %v181
    %v186 = vmul.f32 %v173, %v182
    %v187 = vmul.f32 %v174, %v181
    %v188 = vmul.f32 %v175, %v182
    %v189 = vmul.f32 %v176, %v181
    %v190 = vmul.f32 %v177, %v182
    %v191 = vmul.f32 %v178, %v181
    %v192 = vmul.f32 %v179, %v182
    %193 = vrot.lane.b32.xlu0 %v105, 112
    %v194 = vpop.permute.xlu0 %193
    %195 = vrot.lane.b32.xlu0 %v106, 112
    %v196 = vpop.permute.xlu0 %195
    %197 = vrot.lane.b32.xlu0 %v107, 112
    %v198 = vpop.permute.xlu0 %197
    %199 = vrot.lane.b32.xlu0 %v108, 112
    %v200 = vpop.permute.xlu0 %199
    %201 = vrot.lane.b32.xlu0 %v109, 112
    %v202 = vpop.permute.xlu0 %201
    %203 = vrot.lane.b32.xlu0 %v110, 112
    %v204 = vpop.permute.xlu0 %203
    %205 = vrot.lane.b32.xlu0 %v111, 112
    %v206 = vpop.permute.xlu0 %205
    %207 = vrot.lane.b32.xlu0 %v112, 112
    %v208 = vpop.permute.xlu0 %207
    %209 = vrot.lane.b32.xlu0 %v113, 112
    %v210 = vpop.permute.xlu0 %209
    %211 = vrot.lane.b32.xlu0 %v114, 112
    %v212 = vpop.permute.xlu0 %211
    %213 = vrot.lane.b32.xlu0 %v115, 112
    %v214 = vpop.permute.xlu0 %213
    %215 = vrot.lane.b32.xlu0 %v116, 112
    %v216 = vpop.permute.xlu0 %215
    %vm217 = vcmask 916480
    %v218 = vsel %vm217, %v194, %v196
    %v219 = vsel %vm217, %v196, %v198
    %v220 = vsel %vm217, %v200, %v202
    %v221 = vsel %vm217, %v202, %v204
    %v222 = vsel %vm217, %v206, %v208
    %v223 = vsel %vm217, %v208, %v210
    %v224 = vsel %vm217, %v212, %v214
    %v225 = vsel %vm217, %v214, %v216
    %v234 = vmul.f32 %v105, %v218
    %v235 = vmul.f32 %v106, %v219
    %v236 = vmul.f32 %v108, %v220
    %v237 = vmul.f32 %v109, %v221
    %v238 = vmul.f32 %v111, %v222
    %v239 = vmul.f32 %v112, %v223
    %v240 = vmul.f32 %v114, %v224
    %v241 = vmul.f32 %v115, %v225
    %v243 = vperm.slane %v118, 0
    %v244 = vperm.slane %v118, 1
    %v247 = vmul.f32 %v234, %v243
    %v248 = vmul.f32 %v235, %v244
    %v249 = vmul.f32 %v236, %v243
    %v250 = vmul.f32 %v237, %v244
    %v251 = vmul.f32 %v238, %v243
    %v252 = vmul.f32 %v239, %v244
    %v253 = vmul.f32 %v240, %v243
    %v254 = vmul.f32 %v241, %v244
    %263 = vrot.lane.b32.xlu0 %v78, 1
    %v264 = vpop.permute.xlu0 %263
    %265 = vrot.lane.b32.xlu0 %v79, 1
    %v266 = vpop.permute.xlu0 %265
    %267 = vrot.lane.b32.xlu0 %v81, 1
    %v268 = vpop.permute.xlu0 %267
    %269 = vrot.lane.b32.xlu0 %v82, 1
    %v270 = vpop.permute.xlu0 %269
    %271 = vrot.lane.b32.xlu0 %v84, 1
    %v272 = vpop.permute.xlu0 %271
    %273 = vrot.lane.b32.xlu0 %v85, 1
    %v274 = vpop.permute.xlu0 %273
    %275 = vrot.lane.b32.xlu0 %v87, 1
    %v276 = vpop.permute.xlu0 %275
    %277 = vrot.lane.b32.xlu0 %v88, 1
    %v278 = vpop.permute.xlu0 %277
    %vm279 = vcmask 7168
    %v280 = vsel %vm279, %v264, %v266
    %v281 = vsel %vm279, %v268, %v270
    %v282 = vsel %vm279, %v272, %v274
    %v283 = vsel %vm279, %v276, %v278
    %v296 = vsub.f32 %v78, %v264
    %v297 = vsub.f32 %v79, %v280
    %v298 = vsub.f32 %v80, %v266
    %v299 = vsub.f32 %v81, %v268
    %v300 = vsub.f32 %v82, %v281
    %v301 = vsub.f32 %v83, %v270
    %v302 = vsub.f32 %v84, %v272
    %v303 = vsub.f32 %v85, %v282
    %v304 = vsub.f32 %v86, %v274
    %v305 = vsub.f32 %v87, %v276
    %v306 = vsub.f32 %v88, %v283
    %v307 = vsub.f32 %v89, %v278
    %v308 = vand.u32 2147483647, %v296
    %v309 = vand.u32 2147483647, %v297
    %v310 = vand.u32 2147483647, %v298
    %v311 = vand.u32 2147483647, %v299
    %v312 = vand.u32 2147483647, %v300
    %v313 = vand.u32 2147483647, %v301
    %v314 = vand.u32 2147483647, %v302
    %v315 = vand.u32 2147483647, %v303
    %v316 = vand.u32 2147483647, %v304
    %v317 = vand.u32 2147483647, %v305
    %v318 = vand.u32 2147483647, %v306
    %v319 = vand.u32 2147483647, %v307
    %v320 = vrsqrt.pop %v308
    %v321 = vmul.f32 %v320, %v308
    %v322 = vmul.f32 %v321, %v320
    %v323 = vmul.f32 0.5, %v322
    %v324 = vsub.f32 1.5, %v323
    %v325 = vmul.f32 %v320, %v324
    %v326 = vmul.f32 %v308, %v325
    %vm327 = vcmp.eq.f32.partialorder %v308, inf
    %v328 = vsel %vm327, %v308, %v326
    %vm329 = vcmp.eq.f32.partialorder %v308, 0.0
    %v330 = vand.u32 %v308, 2147483648
    %v331 = vsel %vm329, %v330, %v328
    %v332 = vrsqrt.pop %v309
    %v333 = vmul.f32 %v332, %v309
    %v334 = vmul.f32 %v333, %v332
    %v335 = vmul.f32 0.5, %v334
    %v336 = vsub.f32 1.5, %v335
    %v337 = vmul.f32 %v332, %v336
    %v338 = vmul.f32 %v309, %v337
    %vm339 = vcmp.eq.f32.partialorder %v309, inf
    %v340 = vsel %vm339, %v309, %v338
    %vm341 = vcmp.eq.f32.partialorder %v309, 0.0
    %v342 = vand.u32 %v309, 2147483648
    %v343 = vsel %vm341, %v342, %v340
    %v344 = vrsqrt.pop %v310
    %v345 = vmul.f32 %v344, %v310
    %v346 = vmul.f32 %v345, %v344
    %v347 = vmul.f32 0.5, %v346
    %v348 = vsub.f32 1.5, %v347
    %v349 = vmul.f32 %v344, %v348
    %v350 = vmul.f32 %v310, %v349
    %vm351 = vcmp.eq.f32.partialorder %v310, inf
    %v352 = vsel %vm351, %v310, %v350
    %vm353 = vcmp.eq.f32.partialorder %v310, 0.0
    %v354 = vand.u32 %v310, 2147483648
    %v355 = vsel %vm353, %v354, %v352
    %v356 = vrsqrt.pop %v311
    %v357 = vmul.f32 %v356, %v311
    %v358 = vmul.f32 %v357, %v356
    %v359 = vmul.f32 0.5, %v358
    %v360 = vsub.f32 1.5, %v359
    %v361 = vmul.f32 %v356, %v360
    %v362 = vmul.f32 %v311, %v361
    %vm363 = vcmp.eq.f32.partialorder %v311, inf
    %v364 = vsel %vm363, %v311, %v362
    %vm365 = vcmp.eq.f32.partialorder %v311, 0.0
    %v366 = vand.u32 %v311, 2147483648
    %v367 = vsel %vm365, %v366, %v364
    %v368 = vrsqrt.pop %v312
    %v369 = vmul.f32 %v368, %v312
    %v370 = vmul.f32 %v369, %v368
    %v371 = vmul.f32 0.5, %v370
    %v372 = vsub.f32 1.5, %v371
    %v373 = vmul.f32 %v368, %v372
    %v374 = vmul.f32 %v312, %v373
    %vm375 = vcmp.eq.f32.partialorder %v312, inf
    %v376 = vsel %vm375, %v312, %v374
    %vm377 = vcmp.eq.f32.partialorder %v312, 0.0
    %v378 = vand.u32 %v312, 2147483648
    %v379 = vsel %vm377, %v378, %v376
    %v380 = vrsqrt.pop %v313
    %v381 = vmul.f32 %v380, %v313
    %v382 = vmul.f32 %v381, %v380
    %v383 = vmul.f32 0.5, %v382
    %v384 = vsub.f32 1.5, %v383
    %v385 = vmul.f32 %v380, %v384
    %v386 = vmul.f32 %v313, %v385
    %vm387 = vcmp.eq.f32.partialorder %v313, inf
    %v388 = vsel %vm387, %v313, %v386
    %vm389 = vcmp.eq.f32.partialorder %v313, 0.0
    %v390 = vand.u32 %v313, 2147483648
    %v391 = vsel %vm389, %v390, %v388
    %v392 = vrsqrt.pop %v314
    %v393 = vmul.f32 %v392, %v314
    %v394 = vmul.f32 %v393, %v392
    %v395 = vmul.f32 0.5, %v394
    %v396 = vsub.f32 1.5, %v395
    %v397 = vmul.f32 %v392, %v396
    %v398 = vmul.f32 %v314, %v397
    %vm399 = vcmp.eq.f32.partialorder %v314, inf
    %v400 = vsel %vm399, %v314, %v398
    %vm401 = vcmp.eq.f32.partialorder %v314, 0.0
    %v402 = vand.u32 %v314, 2147483648
    %v403 = vsel %vm401, %v402, %v400
    %v404 = vrsqrt.pop %v315
    %v405 = vmul.f32 %v404, %v315
    %v406 = vmul.f32 %v405, %v404
    %v407 = vmul.f32 0.5, %v406
    %v408 = vsub.f32 1.5, %v407
    %v409 = vmul.f32 %v404, %v408
    %v410 = vmul.f32 %v315, %v409
    %vm411 = vcmp.eq.f32.partialorder %v315, inf
    %v412 = vsel %vm411, %v315, %v410
    %vm413 = vcmp.eq.f32.partialorder %v315, 0.0
    %v414 = vand.u32 %v315, 2147483648
    %v415 = vsel %vm413, %v414, %v412
    %v416 = vrsqrt.pop %v316
    %v417 = vmul.f32 %v416, %v316
    %v418 = vmul.f32 %v417, %v416
    %v419 = vmul.f32 0.5, %v418
    %v420 = vsub.f32 1.5, %v419
    %v421 = vmul.f32 %v416, %v420
    %v422 = vmul.f32 %v316, %v421
    %vm423 = vcmp.eq.f32.partialorder %v316, inf
    %v424 = vsel %vm423, %v316, %v422
    %vm425 = vcmp.eq.f32.partialorder %v316, 0.0
    %v426 = vand.u32 %v316, 2147483648
    %v427 = vsel %vm425, %v426, %v424
    %v428 = vrsqrt.pop %v317
    %v429 = vmul.f32 %v428, %v317
    %v430 = vmul.f32 %v429, %v428
    %v431 = vmul.f32 0.5, %v430
    %v432 = vsub.f32 1.5, %v431
    %v433 = vmul.f32 %v428, %v432
    %v434 = vmul.f32 %v317, %v433
    %vm435 = vcmp.eq.f32.partialorder %v317, inf
    %v436 = vsel %vm435, %v317, %v434
    %vm437 = vcmp.eq.f32.partialorder %v317, 0.0
    %v438 = vand.u32 %v317, 2147483648
    %v439 = vsel %vm437, %v438, %v436
    %v440 = vrsqrt.pop %v318
    %v441 = vmul.f32 %v440, %v318
    %v442 = vmul.f32 %v441, %v440
    %v443 = vmul.f32 0.5, %v442
    %v444 = vsub.f32 1.5, %v443
    %v445 = vmul.f32 %v440, %v444
    %v446 = vmul.f32 %v318, %v445
    %vm447 = vcmp.eq.f32.partialorder %v318, inf
    %v448 = vsel %vm447, %v318, %v446
    %vm449 = vcmp.eq.f32.partialorder %v318, 0.0
    %v450 = vand.u32 %v318, 2147483648
    %v451 = vsel %vm449, %v450, %v448
    %v452 = vrsqrt.pop %v319
    %v453 = vmul.f32 %v452, %v319
    %v454 = vmul.f32 %v453, %v452
    %v455 = vmul.f32 0.5, %v454
    %v456 = vsub.f32 1.5, %v455
    %v457 = vmul.f32 %v452, %v456
    %v458 = vmul.f32 %v319, %v457
    %vm459 = vcmp.eq.f32.partialorder %v319, inf
    %v460 = vsel %vm459, %v319, %v458
    %vm461 = vcmp.eq.f32.partialorder %v319, 0.0
    %v462 = vand.u32 %v319, 2147483648
    %v463 = vsel %vm461, %v462, %v460
    %472 = vrot.lane.b32.xlu0 %v185, 1
    %v473 = vpop.permute.xlu0 %472
    %474 = vrot.lane.b32.xlu0 %v186, 1
    %v475 = vpop.permute.xlu0 %474
    %476 = vrot.lane.b32.xlu0 %v187, 1
    %v477 = vpop.permute.xlu0 %476
    %478 = vrot.lane.b32.xlu0 %v188, 1
    %v479 = vpop.permute.xlu0 %478
    %480 = vrot.lane.b32.xlu0 %v189, 1
    %v481 = vpop.permute.xlu0 %480
    %482 = vrot.lane.b32.xlu0 %v190, 1
    %v483 = vpop.permute.xlu0 %482
    %484 = vrot.lane.b32.xlu0 %v191, 1
    %v485 = vpop.permute.xlu0 %484
    %486 = vrot.lane.b32.xlu0 %v192, 1
    %v487 = vpop.permute.xlu0 %486
    %v488 = vsel %vm279, %v473, %v475
    %v489 = vsel %vm279, %v477, %v479
    %v490 = vsel %vm279, %v481, %v483
    %v491 = vsel %vm279, %v485, %v487
    %v504 = vmul.f32 %v331, %v473
    %v505 = vmul.f32 %v343, %v488
    %v506 = vmul.f32 %v355, %v475
    %v507 = vmul.f32 %v367, %v477
    %v508 = vmul.f32 %v379, %v489
    %v509 = vmul.f32 %v391, %v479
    %v510 = vmul.f32 %v403, %v481
    %v511 = vmul.f32 %v415, %v490
    %v512 = vmul.f32 %v427, %v483
    %v513 = vmul.f32 %v439, %v485
    %v514 = vmul.f32 %v451, %v491
    %v515 = vmul.f32 %v463, %v487
    %516 = vrot.lane.b32.xlu0 %v78, 16
    %v517 = vpop.permute.xlu0 %516
    %518 = vrot.lane.b32.xlu0 %v79, 16
    %v519 = vpop.permute.xlu0 %518
    %520 = vrot.lane.b32.xlu0 %v81, 16
    %v521 = vpop.permute.xlu0 %520
    %522 = vrot.lane.b32.xlu0 %v82, 16
    %v523 = vpop.permute.xlu0 %522
    %524 = vrot.lane.b32.xlu0 %v84, 16
    %v525 = vpop.permute.xlu0 %524
    %526 = vrot.lane.b32.xlu0 %v85, 16
    %v527 = vpop.permute.xlu0 %526
    %528 = vrot.lane.b32.xlu0 %v87, 16
    %v529 = vpop.permute.xlu0 %528
    %530 = vrot.lane.b32.xlu0 %v88, 16
    %v531 = vpop.permute.xlu0 %530
    %vm532 = vcmask 130048
    %v533 = vsel %vm532, %v517, %v519
    %v534 = vsel %vm532, %v521, %v523
    %v535 = vsel %vm532, %v525, %v527
    %v536 = vsel %vm532, %v529, %v531
    %v549 = vsub.f32 %v78, %v517
    %v550 = vsub.f32 %v79, %v533
    %v551 = vsub.f32 %v80, %v519
    %v552 = vsub.f32 %v81, %v521
    %v553 = vsub.f32 %v82, %v534
    %v554 = vsub.f32 %v83, %v523
    %v555 = vsub.f32 %v84, %v525
    %v556 = vsub.f32 %v85, %v535
    %v557 = vsub.f32 %v86, %v527
    %v558 = vsub.f32 %v87, %v529
    %v559 = vsub.f32 %v88, %v536
    %v560 = vsub.f32 %v89, %v531
    %v561 = vand.u32 2147483647, %v549
    %v562 = vand.u32 2147483647, %v550
    %v563 = vand.u32 2147483647, %v551
    %v564 = vand.u32 2147483647, %v552
    %v565 = vand.u32 2147483647, %v553
    %v566 = vand.u32 2147483647, %v554
    %v567 = vand.u32 2147483647, %v555
    %v568 = vand.u32 2147483647, %v556
    %v569 = vand.u32 2147483647, %v557
    %v570 = vand.u32 2147483647, %v558
    %v571 = vand.u32 2147483647, %v559
    %v572 = vand.u32 2147483647, %v560
    %v573 = vrsqrt.pop %v561
    %v574 = vmul.f32 %v573, %v561
    %v575 = vmul.f32 %v574, %v573
    %v576 = vmul.f32 0.5, %v575
    %v577 = vsub.f32 1.5, %v576
    %v578 = vmul.f32 %v573, %v577
    %v579 = vmul.f32 %v561, %v578
    %vm580 = vcmp.eq.f32.partialorder %v561, inf
    %v581 = vsel %vm580, %v561, %v579
    %vm582 = vcmp.eq.f32.partialorder %v561, 0.0
    %v583 = vand.u32 %v561, 2147483648
    %v584 = vsel %vm582, %v583, %v581
    %v585 = vrsqrt.pop %v562
    %v586 = vmul.f32 %v585, %v562
    %v587 = vmul.f32 %v586, %v585
    %v588 = vmul.f32 0.5, %v587
    %v589 = vsub.f32 1.5, %v588
    %v590 = vmul.f32 %v585, %v589
    %v591 = vmul.f32 %v562, %v590
    %vm592 = vcmp.eq.f32.partialorder %v562, inf
    %v593 = vsel %vm592, %v562, %v591
    %vm594 = vcmp.eq.f32.partialorder %v562, 0.0
    %v595 = vand.u32 %v562, 2147483648
    %v596 = vsel %vm594, %v595, %v593
    %v597 = vrsqrt.pop %v563
    %v598 = vmul.f32 %v597, %v563
    %v599 = vmul.f32 %v598, %v597
    %v600 = vmul.f32 0.5, %v599
    %v601 = vsub.f32 1.5, %v600
    %v602 = vmul.f32 %v597, %v601
    %v603 = vmul.f32 %v563, %v602
    %vm604 = vcmp.eq.f32.partialorder %v563, inf
    %v605 = vsel %vm604, %v563, %v603
    %vm606 = vcmp.eq.f32.partialorder %v563, 0.0
    %v607 = vand.u32 %v563, 2147483648
    %v608 = vsel %vm606, %v607, %v605
    %v609 = vrsqrt.pop %v564
    %v610 = vmul.f32 %v609, %v564
    %v611 = vmul.f32 %v610, %v609
    %v612 = vmul.f32 0.5, %v611
    %v613 = vsub.f32 1.5, %v612
    %v614 = vmul.f32 %v609, %v613
    %v615 = vmul.f32 %v564, %v614
    %vm616 = vcmp.eq.f32.partialorder %v564, inf
    %v617 = vsel %vm616, %v564, %v615
    %vm618 = vcmp.eq.f32.partialorder %v564, 0.0
    %v619 = vand.u32 %v564, 2147483648
    %v620 = vsel %vm618, %v619, %v617
    %v621 = vrsqrt.pop %v565
    %v622 = vmul.f32 %v621, %v565
    %v623 = vmul.f32 %v622, %v621
    %v624 = vmul.f32 0.5, %v623
    %v625 = vsub.f32 1.5, %v624
    %v626 = vmul.f32 %v621, %v625
    %v627 = vmul.f32 %v565, %v626
    %vm628 = vcmp.eq.f32.partialorder %v565, inf
    %v629 = vsel %vm628, %v565, %v627
    %vm630 = vcmp.eq.f32.partialorder %v565, 0.0
    %v631 = vand.u32 %v565, 2147483648
    %v632 = vsel %vm630, %v631, %v629
    %v633 = vrsqrt.pop %v566
    %v634 = vmul.f32 %v633, %v566
    %v635 = vmul.f32 %v634, %v633
    %v636 = vmul.f32 0.5, %v635
    %v637 = vsub.f32 1.5, %v636
    %v638 = vmul.f32 %v633, %v637
    %v639 = vmul.f32 %v566, %v638
    %vm640 = vcmp.eq.f32.partialorder %v566, inf
    %v641 = vsel %vm640, %v566, %v639
    %vm642 = vcmp.eq.f32.partialorder %v566, 0.0
    %v643 = vand.u32 %v566, 2147483648
    %v644 = vsel %vm642, %v643, %v641
    %v645 = vrsqrt.pop %v567
    %v646 = vmul.f32 %v645, %v567
    %v647 = vmul.f32 %v646, %v645
    %v648 = vmul.f32 0.5, %v647
    %v649 = vsub.f32 1.5, %v648
    %v650 = vmul.f32 %v645, %v649
    %v651 = vmul.f32 %v567, %v650
    %vm652 = vcmp.eq.f32.partialorder %v567, inf
    %v653 = vsel %vm652, %v567, %v651
    %vm654 = vcmp.eq.f32.partialorder %v567, 0.0
    %v655 = vand.u32 %v567, 2147483648
    %v656 = vsel %vm654, %v655, %v653
    %v657 = vrsqrt.pop %v568
    %v658 = vmul.f32 %v657, %v568
    %v659 = vmul.f32 %v658, %v657
    %v660 = vmul.f32 0.5, %v659
    %v661 = vsub.f32 1.5, %v660
    %v662 = vmul.f32 %v657, %v661
    %v663 = vmul.f32 %v568, %v662
    %vm664 = vcmp.eq.f32.partialorder %v568, inf
    %v665 = vsel %vm664, %v568, %v663
    %vm666 = vcmp.eq.f32.partialorder %v568, 0.0
    %v667 = vand.u32 %v568, 2147483648
    %v668 = vsel %vm666, %v667, %v665
    %v669 = vrsqrt.pop %v569
    %v670 = vmul.f32 %v669, %v569
    %v671 = vmul.f32 %v670, %v669
    %v672 = vmul.f32 0.5, %v671
    %v673 = vsub.f32 1.5, %v672
    %v674 = vmul.f32 %v669, %v673
    %v675 = vmul.f32 %v569, %v674
    %vm676 = vcmp.eq.f32.partialorder %v569, inf
    %v677 = vsel %vm676, %v569, %v675
    %vm678 = vcmp.eq.f32.partialorder %v569, 0.0
    %v679 = vand.u32 %v569, 2147483648
    %v680 = vsel %vm678, %v679, %v677
    %v681 = vrsqrt.pop %v570
    %v682 = vmul.f32 %v681, %v570
    %v683 = vmul.f32 %v682, %v681
    %v684 = vmul.f32 0.5, %v683
    %v685 = vsub.f32 1.5, %v684
    %v686 = vmul.f32 %v681, %v685
    %v687 = vmul.f32 %v570, %v686
    %vm688 = vcmp.eq.f32.partialorder %v570, inf
    %v689 = vsel %vm688, %v570, %v687
    %vm690 = vcmp.eq.f32.partialorder %v570, 0.0
    %v691 = vand.u32 %v570, 2147483648
    %v692 = vsel %vm690, %v691, %v689
    %v693 = vrsqrt.pop %v571
    %v694 = vmul.f32 %v693, %v571
    %v695 = vmul.f32 %v694, %v693
    %v696 = vmul.f32 0.5, %v695
    %v697 = vsub.f32 1.5, %v696
    %v698 = vmul.f32 %v693, %v697
    %v699 = vmul.f32 %v571, %v698
    %vm700 = vcmp.eq.f32.partialorder %v571, inf
    %v701 = vsel %vm700, %v571, %v699
    %vm702 = vcmp.eq.f32.partialorder %v571, 0.0
    %v703 = vand.u32 %v571, 2147483648
    %v704 = vsel %vm702, %v703, %v701
    %v705 = vrsqrt.pop %v572
    %v706 = vmul.f32 %v705, %v572
    %v707 = vmul.f32 %v706, %v705
    %v708 = vmul.f32 0.5, %v707
    %v709 = vsub.f32 1.5, %v708
    %v710 = vmul.f32 %v705, %v709
    %v711 = vmul.f32 %v572, %v710
    %vm712 = vcmp.eq.f32.partialorder %v572, inf
    %v713 = vsel %vm712, %v572, %v711
    %vm714 = vcmp.eq.f32.partialorder %v572, 0.0
    %v715 = vand.u32 %v572, 2147483648
    %v716 = vsel %vm714, %v715, %v713
    %725 = vrot.lane.b32.xlu0 %v247, 16
    %v726 = vpop.permute.xlu0 %725
    %727 = vrot.lane.b32.xlu0 %v248, 16
    %v728 = vpop.permute.xlu0 %727
    %729 = vrot.lane.b32.xlu0 %v249, 16
    %v730 = vpop.permute.xlu0 %729
    %731 = vrot.lane.b32.xlu0 %v250, 16
    %v732 = vpop.permute.xlu0 %731
    %733 = vrot.lane.b32.xlu0 %v251, 16
    %v734 = vpop.permute.xlu0 %733
    %735 = vrot.lane.b32.xlu0 %v252, 16
    %v736 = vpop.permute.xlu0 %735
    %737 = vrot.lane.b32.xlu0 %v253, 16
    %v738 = vpop.permute.xlu0 %737
    %739 = vrot.lane.b32.xlu0 %v254, 16
    %v740 = vpop.permute.xlu0 %739
    %v741 = vsel %vm532, %v726, %v728
    %v742 = vsel %vm532, %v730, %v732
    %v743 = vsel %vm532, %v734, %v736
    %v744 = vsel %vm532, %v738, %v740
    %v757 = vmul.f32 %v584, %v726
    %v758 = vmul.f32 %v596, %v741
    %v759 = vmul.f32 %v608, %v728
    %v760 = vmul.f32 %v620, %v730
    %v761 = vmul.f32 %v632, %v742
    %v762 = vmul.f32 %v644, %v732
    %v763 = vmul.f32 %v656, %v734
    %v764 = vmul.f32 %v668, %v743
    %v765 = vmul.f32 %v680, %v736
    %v766 = vmul.f32 %v692, %v738
    %v767 = vmul.f32 %v704, %v744
    %v768 = vmul.f32 %v716, %v740
    %781 = vrot.lane.b32.xlu0 %v757, 113
    %v782 = vpop.permute.xlu0 %781
    %783 = vrot.lane.b32.xlu0 %v758, 113
    %v784 = vpop.permute.xlu0 %783
    %785 = vrot.lane.b32.xlu0 %v759, 113
    %v786 = vpop.permute.xlu0 %785
    %787 = vrot.lane.b32.xlu0 %v760, 113
    %v788 = vpop.permute.xlu0 %787
    %789 = vrot.lane.b32.xlu0 %v761, 113
    %v790 = vpop.permute.xlu0 %789
    %791 = vrot.lane.b32.xlu0 %v762, 113
    %v792 = vpop.permute.xlu0 %791
    %793 = vrot.lane.b32.xlu0 %v763, 113
    %v794 = vpop.permute.xlu0 %793
    %795 = vrot.lane.b32.xlu0 %v764, 113
    %v796 = vpop.permute.xlu0 %795
    %797 = vrot.lane.b32.xlu0 %v765, 113
    %v798 = vpop.permute.xlu0 %797
    %799 = vrot.lane.b32.xlu0 %v766, 113
    %v800 = vpop.permute.xlu0 %799
    %801 = vrot.lane.b32.xlu0 %v767, 113
    %v802 = vpop.permute.xlu0 %801
    %803 = vrot.lane.b32.xlu0 %v768, 113
    %v804 = vpop.permute.xlu0 %803
    %vm805 = vcmask 924672
    %v806 = vsel %vm805, %v782, %v784
    %v807 = vsel %vm805, %v784, %v786
    %v808 = vsel %vm805, %v788, %v790
    %v809 = vsel %vm805, %v790, %v792
    %v810 = vsel %vm805, %v794, %v796
    %v811 = vsel %vm805, %v796, %v798
    %v812 = vsel %vm805, %v800, %v802
    %v813 = vsel %vm805, %v802, %v804
    %v826 = vadd.f32 %v504, %v806
    %v827 = vadd.f32 %v505, %v807
    %v828 = vadd.f32 %v506, %v786
    %v829 = vadd.f32 %v507, %v808
    %v830 = vadd.f32 %v508, %v809
    %v831 = vadd.f32 %v509, %v792
    %v832 = vadd.f32 %v510, %v810
    %v833 = vadd.f32 %v511, %v811
    %v834 = vadd.f32 %v512, %v798
    %v835 = vadd.f32 %v513, %v812
    %v836 = vadd.f32 %v514, %v813
    %v837 = vadd.f32 %v515, %v804
    %v838 = vadd.f32 %v185, %v247
    %v839 = vadd.f32 %v186, %v248
    %v840 = vadd.f32 %v187, %v249
    %v841 = vadd.f32 %v188, %v250
    %v842 = vadd.f32 %v189, %v251
    %v843 = vadd.f32 %v190, %v252
    %v844 = vadd.f32 %v191, %v253
    %v845 = vadd.f32 %v192, %v254
    %vm846 = vcmask 1047560
    %v847 = vsel %vm846, %v826, 0.0
    %v848 = vsel %vm846, %v829, 0.0
    %v849 = vadd.f32 %v847, %v848
    %v850 = vsel %vm846, %v832, 0.0
    %v851 = vadd.f32 %v849, %v850
    %v852 = vsel %vm846, %v835, 0.0
    %v853 = vadd.f32 %v851, %v852
    %v854 = vrot.slane %v853, 4
    %v855 = vadd.f32 %v853, %v854
    %v856 = vrot.slane %v855, 2
    %v857 = vadd.f32 %v855, %v856
    %v858 = vrot.slane %v857, 1
    %v859 = vadd.f32 %v857, %v858
    %v860 = vadd.f32 %v827, %v830
    %v861 = vadd.f32 %v860, %v833
    %v862 = vadd.f32 %v861, %v836
    %v863 = vrot.slane %v862, 4
    %v864 = vadd.f32 %v862, %v863
    %v865 = vrot.slane %v864, 2
    %v866 = vadd.f32 %v864, %v865
    %v867 = vrot.slane %v866, 1
    %v868 = vadd.f32 %v866, %v867
    %v869 = vsel %vm279, %v828, 0.0
    %v870 = vsel %vm279, %v831, 0.0
    %v871 = vadd.f32 %v869, %v870
    %v872 = vsel %vm279, %v834, 0.0
    %v873 = vadd.f32 %v871, %v872
    %v874 = vsel %vm279, %v837, 0.0
    %v875 = vadd.f32 %v873, %v874
    %v876 = vrot.slane %v875, 4
    %v877 = vadd.f32 %v875, %v876
    %v878 = vrot.slane %v877, 2
    %v879 = vadd.f32 %v877, %v878
    %v880 = vrot.slane %v879, 1
    %v881 = vadd.f32 %v879, %v880
    %v885 = vrot.slane %v868, 7
    %v886 = vrot.slane %v881, 6
    %vm887 = vcmask 1040384
    %v888 = vsel %vm887, %v859, %v885
    %vm889 = vcmask 1041408
    %v890 = vsel %vm889, %v888, %v886
    %891 = vrot.lane.b32.xlu0 %v890, 127
    %v892 = vpop.permute.xlu0 %891
    %v893 = vrot.slane %v892, 1
    %v894 = vsel %vm155, %v892, %v893
    %v896 = vlaneseq
    %vm897 = vcmp.ge.s32.totalorder %v896, 0
    %vm898 = vcmp.lt.s32.totalorder %v896, 256
    %vm899 = vmand %vm897, %vm898
    %900 = vst.msk [vmem:[#allocation10] sm:$0x3] %vm899, %v894
    %v901 = vadd.f32 %v838, %v840
    %v902 = vadd.f32 %v901, %v842
    %v903 = vadd.f32 %v902, %v844
    %v904 = vrot.slane %v903, 4
    %v905 = vadd.f32 %v903, %v904
    %v906 = vrot.slane %v905, 2
    %v907 = vadd.f32 %v905, %v906
    %v908 = vrot.slane %v907, 1
    %v909 = vadd.f32 %v907, %v908
    %v910 = vadd.f32 %v839, %v841
    %v911 = vadd.f32 %v910, %v843
    %v912 = vadd.f32 %v911, %v845
    %v913 = vrot.slane %v912, 4
    %v914 = vadd.f32 %v912, %v913
    %v915 = vrot.slane %v914, 2
    %v916 = vadd.f32 %v914, %v915
    %v917 = vrot.slane %v916, 1
    %v918 = vadd.f32 %v916, %v917
    %v921 = vrot.slane %v918, 7
    %v922 = vsel %vm887, %v909, %v921
    %924 = vst.msk [vmem:[#allocation11] sm:$0x3] %vm899, %v922
    // Predicated region
    $region34: #{tpu_custom_call.1} parent=1 // pred_check
      _
    $region35: #{tpu_custom_call.1} parent=1 // pred_check_branch
      %926 = sbr.rel (0) target = $region37
    $region36: #{tpu_custom_call.1} parent=1 // pred_region
      %928 = vsyncadd [#allocation4], 0
      %s930 = sshll.u32 [#allocation10], 4
      %s931 = int_to_ptr.vmem [resolvable:$true] %s930
      %s932 = sshll.u32 %s4, 4
      %s933 = int_to_ptr.hbm [resolvable:$true] %s932
      %935 = dma.vmem_to_hbm [thread:$0]  %s931, 32, %s933, [#allocation4]
    $region37: #{tpu_custom_call.1} parent=1 // pred_fallthru
      _
    // Predicated region
    $region38: #{tpu_custom_call.1} parent=1 // pred_check
      _
    $region39: #{tpu_custom_call.1} parent=1 // pred_check_branch
      %937 = sbr.rel (0) target = $region41
    $region40: #{tpu_custom_call.1} parent=1 // pred_region
      %939 = vsyncadd [#allocation12], 0
      %s941 = sshll.u32 [#allocation11], 4
      %s942 = int_to_ptr.vmem [resolvable:$true] %s941
      %s943 = sshll.u32 %s5, 4
      %s944 = int_to_ptr.hbm [resolvable:$true] %s943
      %946 = dma.vmem_to_hbm [thread:$0]  %s942, 32, %s944, [#allocation12]
    $region41: #{tpu_custom_call.1} parent=1 // pred_fallthru
      _
    // Predicated region
    $region42: #{tpu_custom_call.1} parent=1 // pred_check
      _
    $region43: #{tpu_custom_call.1} parent=1 // pred_check_branch
      %948 = sbr.rel (0) target = $region45
    $region44: #{tpu_custom_call.1} parent=1 // pred_region
      %950 = dma.done [#allocation4], 32
    $region45: #{tpu_custom_call.1} parent=1 // pred_fallthru
      _
    // Predicated region
    $region46: #{tpu_custom_call.1} parent=1 // pred_check
      _
    $region47: #{tpu_custom_call.1} parent=1 // pred_check_branch
      %952 = sbr.rel (0) target = $region49
    $region48: #{tpu_custom_call.1} parent=1 // pred_region
      %954 = dma.done [#allocation12], 32
    $region49: #{tpu_custom_call.1} parent=1 // pred_fallthru
      _
    %955 = vsyncpa [#allocation3], 1
    %956 = vsyncpa [#allocation6], 1
    %957 = vsyncpa [#allocation9], 1
    %958 = vsyncpa [#allocation4], 1
    %959 = vsyncpa [#allocation12], 1

</llo_original>
